<compile_context>
chip_gen: v7x
topology: tpu7x:2x2x1
jax: 0.10.0
libtpu: 0.0.40
codegen_flags: <defaults>
</compile_context>

<pallas_src>
import functools

import jax
import jax.numpy as jnp
from jax.experimental import pallas as pl
from jax.experimental.pallas import tpu as pltpu

_LANE = 128
_VMEM_DATA_BUDGET = 40 * 1024 * 1024   # per-step pipeline buffers; fits v7x's 64 MiB VMEM
_VMEM_LIMIT_BYTES = 50 * 1024 * 1024


def _round_up(x, m):
    return (x + m - 1) // m * m


def _pick_tile(K, Cout, n_pix, tile_p):
    """Largest lane-aligned pixel tile whose double-buffered blocks fit the VMEM budget."""
    tile = max(_LANE, _round_up(min(tile_p, _round_up(n_pix, _LANE)), _LANE))

    def footprint(t):
        patches = 2 * K * t * 2        # bf16 patch block, double-buffered
        y_out = 2 * Cout * t * 4       # f32 conv-output block, double-buffered
        weight = 2 * Cout * K * 2      # bf16 resident weight (conservatively x2 buffers)
        return patches + y_out + weight

    while tile > _LANE and footprint(tile) > _VMEM_DATA_BUDGET:
        tile -= _LANE
    return tile


def _conv_gemm_kernel(w_ref, x_ref, y_ref, s1_ref, s2_ref):
    # w_ref: (Cout, K) bf16, grid-invariant (pipeliner skips re-copying the unchanged block)
    # x_ref: (K, TILE_P) bf16 im2col patch tile, pixel axis on lanes
    # y_ref: (Cout, TILE_P) f32 lane-dense conv-output tile
    # s1/s2: (Cout, 1) per-tile partial sums of y and y^2 for the BatchNorm batch statistics
    y = jnp.dot(w_ref[...], x_ref[...], preferred_element_type=jnp.float32)
    y_ref[...] = y
    s1_ref[...] = jnp.sum(y, axis=1, keepdims=True)
    s2_ref[...] = jnp.sum(y * y, axis=1, keepdims=True)


def _bn_lrelu_kernel(scale_ref, shift_ref, y_ref, o_ref, *, negative_slope):
    # scale/shift: (Cout, 1) per-channel BN affine; y/o: (Cout, TILE_P) lane-dense
    z = y_ref[...] * scale_ref[...] + shift_ref[...]
    o_ref[...] = jnp.where(z >= 0.0, z, z * negative_slope)


def down_forward(x, weight, gamma, beta, *, eps=1e-5, negative_slope=0.2, tile_p=1024):
    """Forward of `down`: Conv2d(4,4,s=2,p=1,no bias) -> train-mode BatchNorm2d -> LeakyReLU(0.2).

    x:      (B, Cin, H, W) float32 NCHW
    weight: (Cout, Cin, 4, 4)
    gamma, beta: (Cout,)
    Returns (B, Cout, Ho, Wo) float32 NCHW.
    """
    B, Cin, H, W = x.shape
    Cout = weight.shape[0]
    Ho = (H + 2 - 4) // 2 + 1
    Wo = (W + 2 - 4) // 2 + 1
    n_pix = Ho * Wo                 # pixels per image
    total_pix = B * n_pix           # pixels contributing to the BN statistics
    K = 16 * Cin

    # ---- wrapper-side im2col, pixel axis already minor-most (no minor-dim transpose) ----
    x_bf = x.astype(jnp.bfloat16)
    xp = jnp.pad(x_bf, ((0, 0), (0, 0), (1, 1), (1, 1)))                  # (B, Cin, H+2, W+2)
    taps = [xp[:, :, kh:kh + 2 * Ho:2, kw:kw + 2 * Wo:2]                  # each (B, Cin, Ho, Wo)
            for kh in range(4) for kw in range(4)]
    patches = jnp.stack(taps, axis=2).reshape(B, K, n_pix)                # (B, 16*Cin, Ho*Wo)

    tile = _pick_tile(K, Cout, n_pix, tile_p)
    pix_pad = _round_up(n_pix, tile)
    if pix_pad != n_pix:
        patches = jnp.pad(patches, ((0, 0), (0, 0), (0, pix_pad - n_pix)))
    n_t = pix_pad // tile
    grid = (B, n_t)

    # (Cout, Cin, 4, 4) -> (Cout, K); row-major reshape matches the (cin, kh, kw) patch ordering.
    w2 = weight.reshape(Cout, K).astype(jnp.bfloat16)

    cost = pl.CostEstimate(
        flops=2 * B * pix_pad * Cout * K,
        transcendentals=0,
        bytes_accessed=(Cout * K * 2 + B * K * pix_pad * 2
                        + B * Cout * pix_pad * 4 + 2 * B * n_t * Cout * 4),
    )

    # ---- Kernel 1: conv as GEMM + per-tile BN partial sums, lane-dense (Cout, TILE_P) stores ----
    y, s1, s2 = pl.pallas_call(
        _conv_gemm_kernel,
        out_shape=(
            jax.ShapeDtypeStruct((B, Cout, pix_pad), jnp.float32),
            jax.ShapeDtypeStruct((B, n_t, Cout, 1), jnp.float32),
            jax.ShapeDtypeStruct((B, n_t, Cout, 1), jnp.float32),
        ),
        grid_spec=pltpu.PrefetchScalarGridSpec(
            num_scalar_prefetch=0,
            grid=grid,
            in_specs=[
                pl.BlockSpec((Cout, K), lambda b, t: (0, 0)),             # resident bf16 weight
                pl.BlockSpec((None, K, tile), lambda b, t: (b, 0, t)),    # bf16 patch tile
            ],
            out_specs=[
                pl.BlockSpec((None, Cout, tile), lambda b, t: (b, 0, t)),
                pl.BlockSpec((None, None, Cout, 1), lambda b, t: (b, t, 0, 0)),
                pl.BlockSpec((None, None, Cout, 1), lambda b, t: (b, t, 0, 0)),
            ],
        ),
        compiler_params=pltpu.CompilerParams(
            dimension_semantics=("parallel", "parallel"),
            vmem_limit_bytes=_VMEM_LIMIT_BYTES,
        ),
        cost_estimate=cost,
    )(w2, patches)

    # ---- BatchNorm training-mode statistics from the per-tile partial sums (tiny reduce) ----
    # Padded tail pixels have y == 0 (zero patches, no bias) so they add nothing to the sums;
    # dividing by the true pixel count gives the exact batch statistics.
    s1_tot = jnp.sum(s1, axis=(0, 1))                          # (Cout, 1)
    s2_tot = jnp.sum(s2, axis=(0, 1))                          # (Cout, 1)
    mean = s1_tot / total_pix
    var = jnp.maximum(s2_tot / total_pix - mean * mean, 0.0)   # biased var (PyTorch train-mode)
    scale = (gamma.reshape(Cout, 1) / jnp.sqrt(var + eps)).astype(jnp.float32)
    shift = (beta.reshape(Cout, 1) - mean * scale).astype(jnp.float32)

    # ---- Kernel 2: fused BN affine + LeakyReLU(0.2), output aliased onto the conv buffer ----
    kern2 = functools.partial(_bn_lrelu_kernel, negative_slope=negative_slope)
    z = pl.pallas_call(
        kern2,
        out_shape=jax.ShapeDtypeStruct((B, Cout, pix_pad), jnp.float32),
        grid_spec=pltpu.PrefetchScalarGridSpec(
            num_scalar_prefetch=0,
            grid=grid,
            in_specs=[
                pl.BlockSpec((Cout, 1), lambda b, t: (0, 0)),
                pl.BlockSpec((Cout, 1), lambda b, t: (0, 0)),
                pl.BlockSpec((None, Cout, tile), lambda b, t: (b, 0, t)),
            ],
            out_specs=pl.BlockSpec((None, Cout, tile), lambda b, t: (b, 0, t)),
        ),
        compiler_params=pltpu.CompilerParams(
            dimension_semantics=("parallel", "parallel"),
            vmem_limit_bytes=_VMEM_LIMIT_BYTES,
        ),
        input_output_aliases={2: 0},
    )(scale, shift, y)

    return z[:, :, :n_pix].reshape(B, Cout, Ho, Wo)             # already NCHW, no transpose


def _reference_down(x, weight, gamma, beta, *, eps=1e-5, negative_slope=0.2):
    """Pure-JAX reference: conv(4,4,s=2,p=1,no bias) -> train-mode BN -> LeakyReLU(0.2)."""
    y = jax.lax.conv_general_dilated(
        x, weight, window_strides=(2, 2), padding=((1, 1), (1, 1)),
        dimension_numbers=("NCHW", "OIHW", "NCHW"),
        precision=jax.lax.Precision.HIGHEST)
    mean = jnp.mean(y, axis=(0, 2, 3), keepdims=True)
    var = jnp.mean(jnp.square(y - mean), axis=(0, 2, 3), keepdims=True)
    z = (y - mean) / jnp.sqrt(var + eps)
    z = z * gamma.reshape(1, -1, 1, 1) + beta.reshape(1, -1, 1, 1)
    return jnp.where(z >= 0.0, z, z * negative_slope)


if __name__ == "__main__":
    # Small shapes consistent with the module: down(in_ch=4, out_ch=8) on a (2, 4, 16, 16) input.
    in_ch, out_ch = 4, 8
    B, H, W = 2, 16, 16

    key = jax.random.PRNGKey(0)
    kx, kw, kg, kb = jax.random.split(key, 4)

    x = jax.random.normal(kx, (B, in_ch, H, W), dtype=jnp.float32)
    fan_in = in_ch * 4 * 4
    bound = (1.0 / fan_in) ** 0.5   # Conv2d-style uniform init
    weight = jax.random.uniform(kw, (out_ch, in_ch, 4, 4), dtype=jnp.float32,
                                minval=-bound, maxval=bound)
    # Fresh BatchNorm2d has gamma=1, beta=0; perturb slightly to exercise the fused affine.
    gamma = 1.0 + 0.1 * jax.random.normal(kg, (out_ch,), dtype=jnp.float32)
    beta = 0.1 * jax.random.normal(kb, (out_ch,), dtype=jnp.float32)

    out = jax.jit(down_forward)(x, weight, gamma, beta)
    out = jax.block_until_ready(out)

    # Reference uses the same bf16-rounded GEMM inputs (the kernel accumulates in f32 on the MXU).
    xq = x.astype(jnp.bfloat16).astype(jnp.float32)
    wq = weight.astype(jnp.bfloat16).astype(jnp.float32)
    ref = _reference_down(xq, wq, gamma, beta)

    assert out.shape == (B, out_ch, H // 2, W // 2), out.shape
    err = float(jnp.max(jnp.abs(out - ref)))
    assert jnp.allclose(out, ref, atol=1e-3, rtol=1e-3), f"mismatch vs reference, max abs err={err}"

    print("KERNEL_OK")
</pallas_src>

<mosaic_0001>
module attributes {stable_mosaic.version = 11 : i64} {
  func.func @_conv_gemm_kernel(%arg0: i32, %arg1: i32, %arg2: memref<8x64xbf16, #tpu.memory_space<vmem>>, %arg3: memref<1x64x128xbf16, #tpu.memory_space<vmem>>, %arg4: memref<1x8x128xf32, #tpu.memory_space<vmem>>, %arg5: memref<1x1x8x1xf32, #tpu.memory_space<vmem>>, %arg6: memref<1x1x8x1xf32, #tpu.memory_space<vmem>>) attributes {dimension_semantics = [#tpu.dimension_semantics<parallel>, #tpu.dimension_semantics<parallel>], iteration_bounds = array<i64: 2, 1>, scalar_prefetch = 0 : i64, scratch_operands = 0 : i64, tpu.core_type = #tpu.core_type<tc>, window_params = [{pipeline_mode = #tpu.pipeline_mode<synchronous>, transform_indices = @transform_0, window_bounds = array<i64: 8, 64>}, {transform_indices = @transform_1, window_bounds = array<i64: 1, 64, 128>}, {transform_indices = @transform_2, window_bounds = array<i64: 1, 8, 128>}, {transform_indices = @transform_3, window_bounds = array<i64: 1, 1, 8, 1>}, {transform_indices = @transform_4, window_bounds = array<i64: 1, 1, 8, 1>}]} {
    %c0 = arith.constant 0 : index
    %c0_0 = arith.constant 0 : index
    %0 = vector.load %arg2[%c0, %c0_0] : memref<8x64xbf16, #tpu.memory_space<vmem>>, vector<8x64xbf16>
    %c0_1 = arith.constant 0 : index
    %c0_2 = arith.constant 0 : index
    %c0_3 = arith.constant 0 : index
    %1 = vector.load %arg3[%c0_1, %c0_2, %c0_3] : memref<1x64x128xbf16, #tpu.memory_space<vmem>>, vector<1x64x128xbf16>
    %2 = vector.shape_cast %1 : vector<1x64x128xbf16> to vector<64x128xbf16>
    %cst = arith.constant dense<0.000000e+00> : vector<8x128xf32>
    %3 = tpu.matmul %0, %2, %cst {dimension_numbers = #tpu.dot_dimension_numbers<[1], [0], [0], [1], [0, 0, 1, 1], [], []>} : vector<8x64xbf16>, vector<64x128xbf16>, vector<8x128xf32> -> vector<8x128xf32>
    %c0_4 = arith.constant 0 : index
    %c0_5 = arith.constant 0 : index
    %c0_6 = arith.constant 0 : index
    %4 = vector.load %arg4[%c0_4, %c0_5, %c0_6] : memref<1x8x128xf32, #tpu.memory_space<vmem>>, vector<1x8x128xf32>
    %5 = vector.shape_cast %4 : vector<1x8x128xf32> to vector<8x128xf32>
    %6 = vector.shape_cast %3 : vector<8x128xf32> to vector<1x8x128xf32>
    tpu.vector_store %arg4[%c0_4, %c0_5, %c0_6], %6 {strides = array<i32>} : memref<1x8x128xf32, #tpu.memory_space<vmem>>, vector<1x8x128xf32>,
    %cst_7 = arith.constant dense<0.000000e+00> : vector<8xf32>
    %7 = vector.multi_reduction <add>, %3, %cst_7 [1] : vector<8x128xf32> to vector<8xf32>
    %8 = vector.shape_cast %7 : vector<8xf32> to vector<8x1xf32>
    %c0_8 = arith.constant 0 : index
    %c0_9 = arith.constant 0 : index
    %c0_10 = arith.constant 0 : index
    %c0_11 = arith.constant 0 : index
    %9 = vector.load %arg5[%c0_8, %c0_9, %c0_10, %c0_11] : memref<1x1x8x1xf32, #tpu.memory_space<vmem>>, vector<1x1x8x1xf32>
    %10 = vector.shape_cast %9 : vector<1x1x8x1xf32> to vector<8x1xf32>
    %11 = vector.shape_cast %8 : vector<8x1xf32> to vector<1x1x8x1xf32>
    tpu.vector_store %arg5[%c0_8, %c0_9, %c0_10, %c0_11], %11 {strides = array<i32>} : memref<1x1x8x1xf32, #tpu.memory_space<vmem>>, vector<1x1x8x1xf32>,
    %12 = arith.mulf %3, %3 : vector<8x128xf32>
    %cst_12 = arith.constant dense<0.000000e+00> : vector<8xf32>
    %13 = vector.multi_reduction <add>, %12, %cst_12 [1] : vector<8x128xf32> to vector<8xf32>
    %14 = vector.shape_cast %13 : vector<8xf32> to vector<8x1xf32>
    %c0_13 = arith.constant 0 : index
    %c0_14 = arith.constant 0 : index
    %c0_15 = arith.constant 0 : index
    %c0_16 = arith.constant 0 : index
    %15 = vector.load %arg6[%c0_13, %c0_14, %c0_15, %c0_16] : memref<1x1x8x1xf32, #tpu.memory_space<vmem>>, vector<1x1x8x1xf32>
    %16 = vector.shape_cast %15 : vector<1x1x8x1xf32> to vector<8x1xf32>
    %17 = vector.shape_cast %14 : vector<8x1xf32> to vector<1x1x8x1xf32>
    tpu.vector_store %arg6[%c0_13, %c0_14, %c0_15, %c0_16], %17 {strides = array<i32>} : memref<1x1x8x1xf32, #tpu.memory_space<vmem>>, vector<1x1x8x1xf32>,
    return
  }
  func.func @transform_0(%arg0: i32, %arg1: i32) -> (i32, i32) {
    %c0_i32 = arith.constant 0 : i32
    %c0_i32_0 = arith.constant 0 : i32
    %c0_i32_1 = arith.constant 0 : i32
    return %c0_i32, %c0_i32_0 : i32, i32
  }
  func.func @transform_1(%arg0: i32, %arg1: i32) -> (i32, i32, i32) {
    %c0_i32 = arith.constant 0 : i32
    %c0_i32_0 = arith.constant 0 : i32
    return %arg0, %c0_i32, %arg1 : i32, i32, i32
  }
  func.func @transform_2(%arg0: i32, %arg1: i32) -> (i32, i32, i32) {
    %c0_i32 = arith.constant 0 : i32
    %c0_i32_0 = arith.constant 0 : i32
    return %arg0, %c0_i32, %arg1 : i32, i32, i32
  }
  func.func @transform_3(%arg0: i32, %arg1: i32) -> (i32, i32, i32, i32) {
    %c0_i32 = arith.constant 0 : i32
    %c0_i32_0 = arith.constant 0 : i32
    %c0_i32_1 = arith.constant 0 : i32
    return %arg0, %arg1, %c0_i32, %c0_i32_0 : i32, i32, i32, i32
  }
  func.func @transform_4(%arg0: i32, %arg1: i32) -> (i32, i32, i32, i32) {
    %c0_i32 = arith.constant 0 : i32
    %c0_i32_0 = arith.constant 0 : i32
    %c0_i32_1 = arith.constant 0 : i32
    return %arg0, %arg1, %c0_i32, %c0_i32_0 : i32, i32, i32, i32
  }
}

module attributes {stable_mosaic.version = 11 : i64} {
  func.func @_bn_lrelu_kernel(%arg0: i32, %arg1: i32, %arg2: memref<8x1xf32, #tpu.memory_space<vmem>>, %arg3: memref<8x1xf32, #tpu.memory_space<vmem>>, %arg4: memref<1x8x128xf32, #tpu.memory_space<vmem>>, %arg5: memref<1x8x128xf32, #tpu.memory_space<vmem>>) attributes {dimension_semantics = [#tpu.dimension_semantics<parallel>, #tpu.dimension_semantics<parallel>], iteration_bounds = array<i64: 2, 1>, scalar_prefetch = 0 : i64, scratch_operands = 0 : i64, tpu.core_type = #tpu.core_type<tc>, window_params = [{pipeline_mode = #tpu.pipeline_mode<synchronous>, transform_indices = @transform_0, window_bounds = array<i64: 8, 1>}, {pipeline_mode = #tpu.pipeline_mode<synchronous>, transform_indices = @transform_1, window_bounds = array<i64: 8, 1>}, {transform_indices = @transform_2, window_bounds = array<i64: 1, 8, 128>}, {transform_indices = @transform_3, window_bounds = array<i64: 1, 8, 128>}]} {
    %c0 = arith.constant 0 : index
    %c0_0 = arith.constant 0 : index
    %c0_1 = arith.constant 0 : index
    %0 = vector.load %arg4[%c0, %c0_0, %c0_1] : memref<1x8x128xf32, #tpu.memory_space<vmem>>, vector<1x8x128xf32>
    %1 = vector.shape_cast %0 : vector<1x8x128xf32> to vector<8x128xf32>
    %c0_2 = arith.constant 0 : index
    %c0_3 = arith.constant 0 : index
    %2 = vector.load %arg2[%c0_2, %c0_3] : memref<8x1xf32, #tpu.memory_space<vmem>>, vector<8x1xf32>
    %3 = vector.broadcast %2 : vector<8x1xf32> to vector<8x128xf32>
    %4 = arith.mulf %1, %3 : vector<8x128xf32>
    %c0_4 = arith.constant 0 : index
    %c0_5 = arith.constant 0 : index
    %5 = vector.load %arg3[%c0_4, %c0_5] : memref<8x1xf32, #tpu.memory_space<vmem>>, vector<8x1xf32>
    %6 = vector.broadcast %5 : vector<8x1xf32> to vector<8x128xf32>
    %7 = arith.addf %4, %6 : vector<8x128xf32>
    %cst = arith.constant 0.000000e+00 : f32
    %8 = vector.broadcast %cst : f32 to vector<8x128xf32>
    %9 = arith.cmpf oge, %7, %8 : vector<8x128xf32>
    %cst_6 = arith.constant 2.000000e-01 : f32
    %10 = vector.broadcast %cst_6 : f32 to vector<8x128xf32>
    %11 = arith.mulf %7, %10 : vector<8x128xf32>
    %12 = arith.select %9, %7, %11 : vector<8x128xi1>, vector<8x128xf32>
    %c0_7 = arith.constant 0 : index
    %c0_8 = arith.constant 0 : index
    %c0_9 = arith.constant 0 : index
    %13 = vector.load %arg5[%c0_7, %c0_8, %c0_9] : memref<1x8x128xf32, #tpu.memory_space<vmem>>, vector<1x8x128xf32>
    %14 = vector.shape_cast %13 : vector<1x8x128xf32> to vector<8x128xf32>
    %15 = vector.shape_cast %12 : vector<8x128xf32> to vector<1x8x128xf32>
    tpu.vector_store %arg5[%c0_7, %c0_8, %c0_9], %15 {strides = array<i32>} : memref<1x8x128xf32, #tpu.memory_space<vmem>>, vector<1x8x128xf32>,
    return
  }
  func.func @transform_0(%arg0: i32, %arg1: i32) -> (i32, i32) {
    %c0_i32 = arith.constant 0 : i32
    %c0_i32_0 = arith.constant 0 : i32
    %c0_i32_1 = arith.constant 0 : i32
    return %c0_i32, %c0_i32_0 : i32, i32
  }
  func.func @transform_1(%arg0: i32, %arg1: i32) -> (i32, i32) {
    %c0_i32 = arith.constant 0 : i32
    %c0_i32_0 = arith.constant 0 : i32
    %c0_i32_1 = arith.constant 0 : i32
    return %c0_i32, %c0_i32_0 : i32, i32
  }
  func.func @transform_2(%arg0: i32, %arg1: i32) -> (i32, i32, i32) {
    %c0_i32 = arith.constant 0 : i32
    %c0_i32_0 = arith.constant 0 : i32
    return %arg0, %c0_i32, %arg1 : i32, i32, i32
  }
  func.func @transform_3(%arg0: i32, %arg1: i32) -> (i32, i32, i32) {
    %c0_i32 = arith.constant 0 : i32
    %c0_i32_0 = arith.constant 0 : i32
    return %arg0, %c0_i32, %arg1 : i32, i32, i32
  }
}

</mosaic_0001>

<llo_original>
// kernel: down_forward.3
$region0: #{down_forward.3}
  #allocation0 [shape = 'u32[]', space=smem, size = 0x4, offset = 0x4, fixed_abs, tag = 'smem constant byte address 0x4 - core index']
  #allocation1 [shape = 'u32[144,128]{1,0:T(1,128)}', space=vmem, size = 0x12000, scoped, tag = 'internal scratch']
  %s0 = inlined_call_operand.vmem [shape: f32[8,1], index: 0, kind: input, shape index: {}]
  %s1 = inlined_call_operand.vmem [shape: f32[8,1], index: 1, kind: input, shape index: {}]
  %s2 = inlined_call_operand.vmem [shape: f32[2,8,128], index: 2, kind: input, shape index: {}, may-alias: {2,3}]
  %s3 = inlined_call_operand.vmem [shape: f32[2,8,128], index: 3, kind: output, shape index: {}, may-alias: {2,3}]
  %s4 = sld [smem:[#allocation0]]
  $region45: #{down_forward.3} parent=0
    _
  %s6 = ssub.s32 1, %s4
  %s7 = scalar_select 0, %s6, %s4
  loop: start=0, step=1, limit=4
  $region2: #{down_forward.3} parent=0 // loop_pre_header
    _
  $region3: #{down_forward.3} parent=0 // loop_header
    %s9 = sphi 0, %s13
    %p10 = scmp.ge.s32.totalorder %s9, 4
    %s16 = sphi 0, %s28
    %s17 = sphi 0, %s24
    %s18 = sphi 0, %s16
    %s19 = sphi 0, %s17
    %s20 = sphi 0, %s18
    %s21 = sphi 0, %s19
    %s29 = sphi 0, %s29
    %s31 = sphi 0, %s29
    %s32 = sphi 0, %s31
    %s46 = sphi 0, %s32
    %s50 = sphi 0, %s50
    %s52 = sphi 0, %s50
    %s53 = sphi 0, %s52
    %s67 = sphi 0, %s53
    %s75 = sphi 0, %s77
    %s78 = sphi 0, %s75
    %s79 = sphi 0, %s78
    %s95 = sphi 0, %s79
    %s103 = sphi 0, %s105
    %s106 = sphi 0, %s103
    %s107 = sphi 0, %s106
    %s123 = sphi 0, %s107
  $region4: #{down_forward.3} parent=0 // loop_header_branch
    %12 = sbr.rel (%p10) target = $region8
  $region5: #{down_forward.3} parent=0 // loop_body
    %s14 = ssub.s32 %s9, 1
    %s15 = ssub.s32 %s9, 2
    %s22 = sadd.s32 1, %s17
    %p23 = scmp.ge.s32.totalorder %s22, 1
    %s24 = scalar_select %p23, 0, %s22
    %s25 = sadd.s32 1, %s16
    %s26 = scalar_select %p23, %s25, %s16
    %p27 = scmp.ge.s32.totalorder %s26, 2
    %s28 = scalar_select %p27, 0, %s26
    %s30 = sadd.s32 %s29, 1
    %p33 = scmp.eq.s32.totalorder %s9, 1
    %p34 = scmp.ne.s32.totalorder %s29, %s31
    %p35 = scmp.eq.s32.totalorder %s9, 0
    %p36 = por %p34, %p35
    %p37 = scmp.ne.s32.totalorder %s29, %s31
    %p38 = scmp.eq.s32.totalorder %s14, 1
    %p39 = por %p37, %p38
    %p40 = scmp.ne.s32.totalorder %s31, %s32
    %p41 = scmp.eq.s32.totalorder %s14, 0
    %p42 = por %p40, %p41
    %p43 = scmp.ne.s32.totalorder %s31, %s32
    %p44 = scmp.eq.s32.totalorder %s15, 1
    %p45 = por %p43, %p44
    %p47 = scmp.ne.s32.totalorder %s32, %s46
    %p48 = scmp.eq.s32.totalorder %s15, 0
    %p49 = por %p47, %p48
    %s51 = sadd.s32 %s50, 1
    %p54 = scmp.eq.s32.totalorder %s9, 1
    %p55 = scmp.ne.s32.totalorder %s50, %s52
    %p56 = scmp.eq.s32.totalorder %s9, 0
    %p57 = por %p55, %p56
    %p58 = scmp.ne.s32.totalorder %s50, %s52
    %p59 = scmp.eq.s32.totalorder %s14, 1
    %p60 = por %p58, %p59
    %p61 = scmp.ne.s32.totalorder %s52, %s53
    %p62 = scmp.eq.s32.totalorder %s14, 0
    %p63 = por %p61, %p62
    %p64 = scmp.ne.s32.totalorder %s52, %s53
    %p65 = scmp.eq.s32.totalorder %s15, 1
    %p66 = por %p64, %p65
    %p68 = scmp.ne.s32.totalorder %s53, %s67
    %p69 = scmp.eq.s32.totalorder %s15, 0
    %p70 = por %p68, %p69
    %s71 = ssub.s32 %s16, %s28
    %s72 = ssub.s32 %s17, %s24
    %s73 = sor.u32 %s71, %s72
    %p74 = scmp.eq.s32.totalorder %s73, 0
    %s76 = sadd.s32 %s75, 1
    %s77 = scalar_select %p74, %s75, %s76
    %p80 = pneg %p74
    %p81 = scmp.eq.s32.totalorder %s9, 1
    %p82 = por %p80, %p81
    %p83 = scmp.ne.s32.totalorder %s75, %s78
    %p84 = scmp.eq.s32.totalorder %s9, 0
    %p85 = por %p83, %p84
    %p86 = scmp.ne.s32.totalorder %s75, %s78
    %p87 = scmp.eq.s32.totalorder %s14, 1
    %p88 = por %p86, %p87
    %p89 = scmp.ne.s32.totalorder %s78, %s79
    %p90 = scmp.eq.s32.totalorder %s14, 0
    %p91 = por %p89, %p90
    %p92 = scmp.ne.s32.totalorder %s78, %s79
    %p93 = scmp.eq.s32.totalorder %s15, 1
    %p94 = por %p92, %p93
    %p96 = scmp.ne.s32.totalorder %s79, %s95
    %p97 = scmp.eq.s32.totalorder %s15, 0
    %p98 = por %p96, %p97
    %s99 = ssub.s32 %s16, %s28
    %s100 = ssub.s32 %s17, %s24
    %s101 = sor.u32 %s99, %s100
    %p102 = scmp.eq.s32.totalorder %s101, 0
    %s104 = sadd.s32 %s103, 1
    %s105 = scalar_select %p102, %s103, %s104
    %p108 = pneg %p102
    %p109 = scmp.eq.s32.totalorder %s9, 1
    %p110 = por %p108, %p109
    %p111 = scmp.ne.s32.totalorder %s103, %s106
    %p112 = scmp.eq.s32.totalorder %s9, 0
    %p113 = por %p111, %p112
    %p114 = scmp.ne.s32.totalorder %s103, %s106
    %p115 = scmp.eq.s32.totalorder %s14, 1
    %p116 = por %p114, %p115
    %p117 = scmp.ne.s32.totalorder %s106, %s107
    %p118 = scmp.eq.s32.totalorder %s14, 0
    %p119 = por %p117, %p118
    %p120 = scmp.ne.s32.totalorder %s106, %s107
    %p121 = scmp.eq.s32.totalorder %s15, 1
    %p122 = por %p120, %p121
    %p124 = scmp.ne.s32.totalorder %s107, %s123
    %p125 = scmp.eq.s32.totalorder %s15, 0
    %p126 = por %p124, %p125
    %p127 = scmp.le.s32.totalorder 1, %s9
    %p128 = scmp.lt.s32.totalorder %s9, 3
    %p129 = pnand %p127, %p128
    %p130 = pneg %p129
    // Predicated region
    $region9: #{down_forward.3} parent=5 // pred_check
      _
    $region10: #{down_forward.3} parent=5 // pred_check_branch
      %132 = sbr.rel (%p129) target = $region12
    $region11: #{down_forward.3} parent=5 // pred_region
      %s133 = ssub.s32 %s9, 1
      // Predicated region
      $region13: #{down_forward.3} parent=11 // pred_check
        %p134 = pneg %p42
      $region14: #{down_forward.3} parent=11 // pred_check_branch
        %136 = sbr.rel (%p134) target = $region16
      $region15: #{down_forward.3} parent=11 // pred_region
        _
      $region16: #{down_forward.3} parent=11 // pred_fallthru
        _
      // Predicated region
      $region17: #{down_forward.3} parent=11 // pred_check
        %p137 = pneg %p63
      $region18: #{down_forward.3} parent=11 // pred_check_branch
        %139 = sbr.rel (%p137) target = $region20
      $region19: #{down_forward.3} parent=11 // pred_region
        _
      $region20: #{down_forward.3} parent=11 // pred_fallthru
        _
    $region12: #{down_forward.3} parent=5 // pred_fallthru
      _
    %p140 = scmp.lt.s32.totalorder %s9, 2
    // Predicated region
    $region21: #{down_forward.3} parent=5 // pred_check
      %p141 = pneg %p140
    $region22: #{down_forward.3} parent=5 // pred_check_branch
      %143 = sbr.rel (%p141) target = $region24
    $region23: #{down_forward.3} parent=5 // pred_region
      // Predicated region
      $region25: #{down_forward.3} parent=23 // pred_check
        %p144 = pneg %p85
      $region26: #{down_forward.3} parent=23 // pred_check_branch
        %146 = sbr.rel (%p144) target = $region28
      $region27: #{down_forward.3} parent=23 // pred_region
        %p147 = scmp.lt.s32.totalorder %s16, 1
        %s148 = scalar_select %p147, %s16, 1
        %p149 = scmp.lt.s32.totalorder %s17, 0
        %s150 = scalar_select %p149, %s17, 0
        %s151 = sadd.s32 %s150, %s148
        %s152 = smul.addr %s151, 8
        %s153 = scalar_lea.vmem %s2, %s152
      $region28: #{down_forward.3} parent=23 // pred_fallthru
        _
    $region24: #{down_forward.3} parent=5 // pred_fallthru
      _
    %p154 = scmp.le.s32.totalorder 1, %s9
    %p155 = scmp.lt.s32.totalorder %s9, 3
    %p156 = pnand %p154, %p155
    %p157 = pneg %p156
    // Predicated region
    $region29: #{down_forward.3} parent=5 // pred_check
      _
    $region30: #{down_forward.3} parent=5 // pred_check_branch
      %159 = sbr.rel (%p156) target = $region32
    $region31: #{down_forward.3} parent=5 // pred_region
      %s160 = ssub.s32 %s9, 1
      %p161 = pneg %p42
      %p162 = pneg %p39
      %p163 = pneg %p63
      %p164 = pneg %p60
      %p165 = scmp.lt.s32.totalorder %s18, 1
      %s166 = scalar_select %p165, %s18, 1
      %p167 = scmp.lt.s32.totalorder %s19, 0
      %s168 = scalar_select %p167, %s19, 0
      %s169 = sadd.s32 %s168, %s166
      %s170 = smul.addr %s169, 8
      %s171 = scalar_lea.vmem %s2, %s170
      %p172 = pneg %p91
      %p173 = pneg %p88
      %p174 = pneg %p119
      %p175 = pneg %p116
      %p176 = scmp.lt.s32.totalorder %s18, 1
      %s177 = scalar_select %p176, %s18, 1
      %p178 = scmp.lt.s32.totalorder %s19, 0
      %s179 = scalar_select %p178, %s19, 0
      %s180 = sadd.s32 %s179, %s177
      %s181 = smul.addr %s180, 8
      %s182 = scalar_lea.vmem %s3, %s181
      %p183 = scmp.lt.s32.totalorder %s18, 1
      %s184 = scalar_select %p183, %s18, 1
      %p185 = scmp.lt.s32.totalorder %s19, 0
      %s186 = scalar_select %p185, %s19, 0
      %s187 = sadd.s32 %s186, %s184
      %s188 = smul.addr %s187, 8
      %s189 = scalar_lea.vmem %s2, %s188
      %p190 = scmp.lt.s32.totalorder %s18, 1
      %s191 = scalar_select %p190, %s18, 1
      %p192 = scmp.lt.s32.totalorder %s19, 0
      %s193 = scalar_select %p192, %s19, 0
      %s194 = sadd.s32 %s193, %s191
      %s195 = smul.addr %s194, 8
      %s196 = scalar_lea.vmem %s3, %s195
      %v197 = vld [vmem:[%s189] sm:$0xff]
      %v198 = vld [vmem:[%s0] sm:$0xff]
      %200 = vset.pattern.permute.xlu0 0
      %201 = vperm.xlu0 %200, %v198
      %v202 = vpop.permute.xlu0 %201
      %v204 = vmul.f32 %v197, %v202
      %v205 = vld [vmem:[%s1] sm:$0xff]
      %207 = vset.pattern.permute.xlu0 0
      %208 = vperm.xlu0 %207, %v205
      %v209 = vpop.permute.xlu0 %208
      %v211 = vadd.f32 %v204, %v209
      %vm212 = vcmp.ge.f32.partialorder %v211, 0.0
      %v213 = vmul.f32 %v211, 0.2
      %v214 = vsel %vm212, %v211, %v213
      %215 = vst [vmem:[%s196] sm:$0xff] %v214
      %p216 = scmp.lt.s32.totalorder %s18, 1
      %s217 = scalar_select %p216, %s18, 1
      %p218 = scmp.lt.s32.totalorder %s19, 0
      %s219 = scalar_select %p218, %s19, 0
      %s220 = sadd.s32 %s219, %s217
      %s221 = smul.addr %s220, 8
      %s222 = scalar_lea.vmem %s3, %s221
      // Predicated region
      $region33: #{down_forward.3} parent=31 // pred_check
        %p223 = pneg %p116
      $region34: #{down_forward.3} parent=31 // pred_check_branch
        %225 = sbr.rel (%p223) target = $region36
      $region35: #{down_forward.3} parent=31 // pred_region
        _
      $region36: #{down_forward.3} parent=31 // pred_fallthru
        _
    $region32: #{down_forward.3} parent=5 // pred_fallthru
      _
    %p226 = scmp.le.s32.totalorder 2, %s9
    // Predicated region
    $region37: #{down_forward.3} parent=5 // pred_check
      %p227 = pneg %p226
    $region38: #{down_forward.3} parent=5 // pred_check_branch
      %229 = sbr.rel (%p227) target = $region40
    $region39: #{down_forward.3} parent=5 // pred_region
      %s230 = ssub.s32 %s9, 2
      // Predicated region
      $region41: #{down_forward.3} parent=39 // pred_check
        %p231 = pneg %p122
      $region42: #{down_forward.3} parent=39 // pred_check_branch
        %233 = sbr.rel (%p231) target = $region44
      $region43: #{down_forward.3} parent=39 // pred_region
        %p234 = scmp.lt.s32.totalorder %s20, 1
        %s235 = scalar_select %p234, %s20, 1
        %p236 = scmp.lt.s32.totalorder %s21, 0
        %s237 = scalar_select %p236, %s21, 0
        %s238 = sadd.s32 %s237, %s235
        %s239 = smul.addr %s238, 8
        %s240 = scalar_lea.vmem %s3, %s239
      $region44: #{down_forward.3} parent=39 // pred_fallthru
        _
    $region40: #{down_forward.3} parent=5 // pred_fallthru
      _
  $region6: #{down_forward.3} parent=0 // loop_footer
    %s13 = sadd.s32 1, %s9
  $region7: #{down_forward.3} parent=0 // loop_footer_branch
    %8 = sbr.rel target = $region3
  $region8: #{down_forward.3} parent=0 // loop_exit
    _

// kernel: down_forward.2
$region0: #{down_forward.2}
  #allocation0 [shape = 'u32[]', space=smem, size = 0x4, offset = 0x4, fixed_abs, tag = 'smem constant byte address 0x4 - core index']
  #allocation1 [shape = 'u32[144,128]{1,0:T(1,128)}', space=vmem, size = 0x12000, scoped, tag = 'internal scratch']
  %s0 = inlined_call_operand.vmem [shape: bf16[8,64], index: 0, kind: input, shape index: {}]
  %s1 = inlined_call_operand.vmem [shape: bf16[2,64,128], index: 1, kind: input, shape index: {}]
  %s2 = inlined_call_operand.vmem [shape: f32[2,8,128], index: 2, kind: output, shape index: {0}]
  %s3 = inlined_call_operand.vmem [shape: f32[2,1,8,1], index: 3, kind: output, shape index: {1}]
  %s4 = inlined_call_operand.vmem [shape: f32[2,1,8,1], index: 4, kind: output, shape index: {2}]
  %5 = xla_tuple %s2, %s3, %s4
  %s6 = sld [smem:[#allocation0]]
  $region57: #{down_forward.2} parent=0
    _
  %s8 = ssub.s32 1, %s6
  %s9 = scalar_select 0, %s8, %s6
  loop: start=0, step=1, limit=4
  $region2: #{down_forward.2} parent=0 // loop_pre_header
    _
  $region3: #{down_forward.2} parent=0 // loop_header
    %s11 = sphi 0, %s15
    %p12 = scmp.ge.s32.totalorder %s11, 4
    %s18 = sphi 0, %s30
    %s19 = sphi 0, %s26
    %s20 = sphi 0, %s18
    %s21 = sphi 0, %s19
    %s22 = sphi 0, %s20
    %s23 = sphi 0, %s21
    %s31 = sphi 0, %s31
    %s33 = sphi 0, %s31
    %s34 = sphi 0, %s33
    %s48 = sphi 0, %s34
    %s56 = sphi 0, %s58
    %s59 = sphi 0, %s56
    %s60 = sphi 0, %s59
    %s76 = sphi 0, %s60
    %s84 = sphi 0, %s86
    %s87 = sphi 0, %s84
    %s88 = sphi 0, %s87
    %s104 = sphi 0, %s88
    %s112 = sphi 0, %s114
    %s115 = sphi 0, %s112
    %s116 = sphi 0, %s115
    %s132 = sphi 0, %s116
    %s140 = sphi 0, %s142
    %s143 = sphi 0, %s140
    %s144 = sphi 0, %s143
    %s160 = sphi 0, %s144
  $region4: #{down_forward.2} parent=0 // loop_header_branch
    %14 = sbr.rel (%p12) target = $region8
  $region5: #{down_forward.2} parent=0 // loop_body
    %s16 = ssub.s32 %s11, 1
    %s17 = ssub.s32 %s11, 2
    %s24 = sadd.s32 1, %s19
    %p25 = scmp.ge.s32.totalorder %s24, 1
    %s26 = scalar_select %p25, 0, %s24
    %s27 = sadd.s32 1, %s18
    %s28 = scalar_select %p25, %s27, %s18
    %p29 = scmp.ge.s32.totalorder %s28, 2
    %s30 = scalar_select %p29, 0, %s28
    %s32 = sadd.s32 %s31, 1
    %p35 = scmp.eq.s32.totalorder %s11, 1
    %p36 = scmp.ne.s32.totalorder %s31, %s33
    %p37 = scmp.eq.s32.totalorder %s11, 0
    %p38 = por %p36, %p37
    %p39 = scmp.ne.s32.totalorder %s31, %s33
    %p40 = scmp.eq.s32.totalorder %s16, 1
    %p41 = por %p39, %p40
    %p42 = scmp.ne.s32.totalorder %s33, %s34
    %p43 = scmp.eq.s32.totalorder %s16, 0
    %p44 = por %p42, %p43
    %p45 = scmp.ne.s32.totalorder %s33, %s34
    %p46 = scmp.eq.s32.totalorder %s17, 1
    %p47 = por %p45, %p46
    %p49 = scmp.ne.s32.totalorder %s34, %s48
    %p50 = scmp.eq.s32.totalorder %s17, 0
    %p51 = por %p49, %p50
    %s52 = ssub.s32 %s18, %s30
    %s53 = ssub.s32 %s19, %s26
    %s54 = sor.u32 %s52, %s53
    %p55 = scmp.eq.s32.totalorder %s54, 0
    %s57 = sadd.s32 %s56, 1
    %s58 = scalar_select %p55, %s56, %s57
    %p61 = pneg %p55
    %p62 = scmp.eq.s32.totalorder %s11, 1
    %p63 = por %p61, %p62
    %p64 = scmp.ne.s32.totalorder %s56, %s59
    %p65 = scmp.eq.s32.totalorder %s11, 0
    %p66 = por %p64, %p65
    %p67 = scmp.ne.s32.totalorder %s56, %s59
    %p68 = scmp.eq.s32.totalorder %s16, 1
    %p69 = por %p67, %p68
    %p70 = scmp.ne.s32.totalorder %s59, %s60
    %p71 = scmp.eq.s32.totalorder %s16, 0
    %p72 = por %p70, %p71
    %p73 = scmp.ne.s32.totalorder %s59, %s60
    %p74 = scmp.eq.s32.totalorder %s17, 1
    %p75 = por %p73, %p74
    %p77 = scmp.ne.s32.totalorder %s60, %s76
    %p78 = scmp.eq.s32.totalorder %s17, 0
    %p79 = por %p77, %p78
    %s80 = ssub.s32 %s18, %s30
    %s81 = ssub.s32 %s19, %s26
    %s82 = sor.u32 %s80, %s81
    %p83 = scmp.eq.s32.totalorder %s82, 0
    %s85 = sadd.s32 %s84, 1
    %s86 = scalar_select %p83, %s84, %s85
    %p89 = pneg %p83
    %p90 = scmp.eq.s32.totalorder %s11, 1
    %p91 = por %p89, %p90
    %p92 = scmp.ne.s32.totalorder %s84, %s87
    %p93 = scmp.eq.s32.totalorder %s11, 0
    %p94 = por %p92, %p93
    %p95 = scmp.ne.s32.totalorder %s84, %s87
    %p96 = scmp.eq.s32.totalorder %s16, 1
    %p97 = por %p95, %p96
    %p98 = scmp.ne.s32.totalorder %s87, %s88
    %p99 = scmp.eq.s32.totalorder %s16, 0
    %p100 = por %p98, %p99
    %p101 = scmp.ne.s32.totalorder %s87, %s88
    %p102 = scmp.eq.s32.totalorder %s17, 1
    %p103 = por %p101, %p102
    %p105 = scmp.ne.s32.totalorder %s88, %s104
    %p106 = scmp.eq.s32.totalorder %s17, 0
    %p107 = por %p105, %p106
    %s108 = ssub.s32 %s18, %s30
    %s109 = ssub.s32 %s19, %s26
    %s110 = sor.u32 %s108, %s109
    %p111 = scmp.eq.s32.totalorder %s110, 0
    %s113 = sadd.s32 %s112, 1
    %s114 = scalar_select %p111, %s112, %s113
    %p117 = pneg %p111
    %p118 = scmp.eq.s32.totalorder %s11, 1
    %p119 = por %p117, %p118
    %p120 = scmp.ne.s32.totalorder %s112, %s115
    %p121 = scmp.eq.s32.totalorder %s11, 0
    %p122 = por %p120, %p121
    %p123 = scmp.ne.s32.totalorder %s112, %s115
    %p124 = scmp.eq.s32.totalorder %s16, 1
    %p125 = por %p123, %p124
    %p126 = scmp.ne.s32.totalorder %s115, %s116
    %p127 = scmp.eq.s32.totalorder %s16, 0
    %p128 = por %p126, %p127
    %p129 = scmp.ne.s32.totalorder %s115, %s116
    %p130 = scmp.eq.s32.totalorder %s17, 1
    %p131 = por %p129, %p130
    %p133 = scmp.ne.s32.totalorder %s116, %s132
    %p134 = scmp.eq.s32.totalorder %s17, 0
    %p135 = por %p133, %p134
    %s136 = ssub.s32 %s18, %s30
    %s137 = ssub.s32 %s19, %s26
    %s138 = sor.u32 %s136, %s137
    %p139 = scmp.eq.s32.totalorder %s138, 0
    %s141 = sadd.s32 %s140, 1
    %s142 = scalar_select %p139, %s140, %s141
    %p145 = pneg %p139
    %p146 = scmp.eq.s32.totalorder %s11, 1
    %p147 = por %p145, %p146
    %p148 = scmp.ne.s32.totalorder %s140, %s143
    %p149 = scmp.eq.s32.totalorder %s11, 0
    %p150 = por %p148, %p149
    %p151 = scmp.ne.s32.totalorder %s140, %s143
    %p152 = scmp.eq.s32.totalorder %s16, 1
    %p153 = por %p151, %p152
    %p154 = scmp.ne.s32.totalorder %s143, %s144
    %p155 = scmp.eq.s32.totalorder %s16, 0
    %p156 = por %p154, %p155
    %p157 = scmp.ne.s32.totalorder %s143, %s144
    %p158 = scmp.eq.s32.totalorder %s17, 1
    %p159 = por %p157, %p158
    %p161 = scmp.ne.s32.totalorder %s144, %s160
    %p162 = scmp.eq.s32.totalorder %s17, 0
    %p163 = por %p161, %p162
    %p164 = scmp.le.s32.totalorder 1, %s11
    %p165 = scmp.lt.s32.totalorder %s11, 3
    %p166 = pnand %p164, %p165
    %p167 = pneg %p166
    // Predicated region
    $region9: #{down_forward.2} parent=5 // pred_check
      _
    $region10: #{down_forward.2} parent=5 // pred_check_branch
      %169 = sbr.rel (%p166) target = $region12
    $region11: #{down_forward.2} parent=5 // pred_region
      %s170 = ssub.s32 %s11, 1
      // Predicated region
      $region13: #{down_forward.2} parent=11 // pred_check
        %p171 = pneg %p44
      $region14: #{down_forward.2} parent=11 // pred_check_branch
        %173 = sbr.rel (%p171) target = $region16
      $region15: #{down_forward.2} parent=11 // pred_region
        _
      $region16: #{down_forward.2} parent=11 // pred_fallthru
        _
    $region12: #{down_forward.2} parent=5 // pred_fallthru
      _
    %p174 = scmp.lt.s32.totalorder %s11, 2
    // Predicated region
    $region17: #{down_forward.2} parent=5 // pred_check
      %p175 = pneg %p174
    $region18: #{down_forward.2} parent=5 // pred_check_branch
      %177 = sbr.rel (%p175) target = $region20
    $region19: #{down_forward.2} parent=5 // pred_region
      // Predicated region
      $region21: #{down_forward.2} parent=19 // pred_check
        %p178 = pneg %p66
      $region22: #{down_forward.2} parent=19 // pred_check_branch
        %180 = sbr.rel (%p178) target = $region24
      $region23: #{down_forward.2} parent=19 // pred_region
        %p181 = scmp.lt.s32.totalorder %s18, 1
        %s182 = scalar_select %p181, %s18, 1
        %p183 = scmp.lt.s32.totalorder %s19, 0
        %s184 = scalar_select %p183, %s19, 0
        %s185 = smul.addr %s182, 8
        %s186 = sadd.s32 %s184, %s185
        %s187 = smul.addr %s186, 4
        %s188 = scalar_lea.vmem %s1, %s187
      $region24: #{down_forward.2} parent=19 // pred_fallthru
        _
    $region20: #{down_forward.2} parent=5 // pred_fallthru
      _
    %p189 = scmp.le.s32.totalorder 1, %s11
    %p190 = scmp.lt.s32.totalorder %s11, 3
    %p191 = pnand %p189, %p190
    %p192 = pneg %p191
    // Predicated region
    $region25: #{down_forward.2} parent=5 // pred_check
      _
    $region26: #{down_forward.2} parent=5 // pred_check_branch
      %194 = sbr.rel (%p191) target = $region28
    $region27: #{down_forward.2} parent=5 // pred_region
      %s195 = ssub.s32 %s11, 1
      %p196 = pneg %p44
      %p197 = pneg %p41
      %p198 = scmp.lt.s32.totalorder %s20, 1
      %s199 = scalar_select %p198, %s20, 1
      %p200 = scmp.lt.s32.totalorder %s21, 0
      %s201 = scalar_select %p200, %s21, 0
      %s202 = smul.addr %s199, 8
      %s203 = sadd.s32 %s201, %s202
      %s204 = smul.addr %s203, 4
      %s205 = scalar_lea.vmem %s1, %s204
      %p206 = pneg %p72
      %p207 = pneg %p69
      %p208 = pneg %p100
      %p209 = pneg %p97
      %p210 = scmp.lt.s32.totalorder %s20, 1
      %s211 = scalar_select %p210, %s20, 1
      %p212 = scmp.lt.s32.totalorder %s21, 0
      %s213 = scalar_select %p212, %s21, 0
      %s214 = sadd.s32 %s213, %s211
      %s215 = smul.addr %s214, 8
      %s216 = scalar_lea.vmem %s2, %s215
      %p217 = pneg %p128
      %p218 = pneg %p125
      %p219 = scmp.lt.s32.totalorder %s20, 1
      %s220 = scalar_select %p219, %s20, 1
      %p221 = scmp.lt.s32.totalorder %s21, 0
      %s222 = scalar_select %p221, %s21, 0
      %s223 = sadd.s32 %s222, %s220
      %s224 = smul.addr %s223, 8
      %s225 = scalar_lea.vmem %s3, %s224
      %p226 = pneg %p156
      %p227 = pneg %p153
      %p228 = scmp.lt.s32.totalorder %s20, 1
      %s229 = scalar_select %p228, %s20, 1
      %p230 = scmp.lt.s32.totalorder %s21, 0
      %s231 = scalar_select %p230, %s21, 0
      %s232 = sadd.s32 %s231, %s229
      %s233 = smul.addr %s232, 8
      %s234 = scalar_lea.vmem %s4, %s233
      %p235 = scmp.lt.s32.totalorder %s20, 1
      %s236 = scalar_select %p235, %s20, 1
      %p237 = scmp.lt.s32.totalorder %s21, 0
      %s238 = scalar_select %p237, %s21, 0
      %s239 = smul.addr %s236, 8
      %s240 = sadd.s32 %s238, %s239
      %s241 = smul.addr %s240, 4
      %s242 = scalar_lea.vmem %s1, %s241
      %p243 = scmp.lt.s32.totalorder %s20, 1
      %s244 = scalar_select %p243, %s20, 1
      %p245 = scmp.lt.s32.totalorder %s21, 0
      %s246 = scalar_select %p245, %s21, 0
      %s247 = sadd.s32 %s246, %s244
      %s248 = smul.addr %s247, 8
      %s249 = scalar_lea.vmem %s2, %s248
      %p250 = scmp.lt.s32.totalorder %s20, 1
      %s251 = scalar_select %p250, %s20, 1
      %p252 = scmp.lt.s32.totalorder %s21, 0
      %s253 = scalar_select %p252, %s21, 0
      %s254 = sadd.s32 %s253, %s251
      %s255 = smul.addr %s254, 8
      %s256 = scalar_lea.vmem %s3, %s255
      %p257 = scmp.lt.s32.totalorder %s20, 1
      %s258 = scalar_select %p257, %s20, 1
      %p259 = scmp.lt.s32.totalorder %s21, 0
      %s260 = scalar_select %p259, %s21, 0
      %s261 = sadd.s32 %s260, %s258
      %s262 = smul.addr %s261, 8
      %s263 = scalar_lea.vmem %s4, %s262
      %v265 = vld [vmem:[%s0] sm:$0xf]
      %v266 = vld [vmem:[%s242] sm:$0xf]
      %v267 = vld [vmem:[%s242 + $0x4] sm:$0xf]
      %v268 = vld [vmem:[%s242 + $0x8] sm:$0xf]
      %v269 = vld [vmem:[%s242 + $0xc] sm:$0xf]
      %v270 = vld [vmem:[%s242 + $0x10] sm:$0xf]
      %v271 = vld [vmem:[%s242 + $0x14] sm:$0xf]
      %v272 = vld [vmem:[%s242 + $0x18] sm:$0xf]
      %v273 = vld [vmem:[%s242 + $0x1c] sm:$0xf]
      %v282 = vunpack.c.l.b16 %v266
      %v283 = vunpack.c.l.b16 %v267
      %v284 = vunpack.c.l.b16 %v268
      %v285 = vunpack.c.l.b16 %v269
      %v286 = vunpack.c.l.b16 %v270
      %v287 = vunpack.c.l.b16 %v271
      %v288 = vunpack.c.l.b16 %v272
      %v289 = vunpack.c.l.b16 %v273
      %v290 = vpack.c.b16 %v283, %v282
      %v291 = vpack.c.b16 %v285, %v284
      %v292 = vpack.c.b16 %v287, %v286
      %v293 = vpack.c.b16 %v289, %v288
      %vm298 = vcmask 523264
      %v300 = vsel %vm298, %v265, 0
      %302 = vmatprep.subr.bf16.mxu0 0
      %303 = vmatpush1.bf16.msra.mxu0 %v290
      %304 = vmatprep.subr.bf16.mxu0 0
      %305 = vmatpush1.bf16.msra.mxu0 %v291
      %306 = vmatprep.subr.bf16.mxu0 0
      %307 = vmatpush1.bf16.msra.mxu0 %v292
      %308 = vmatprep.subr.bf16.mxu0 0
      %309 = vmatpush1.bf16.msra.mxu0 %v293
      %310 = vmatprep.subr.bf16.mxu0 0
      %311 = vmatpush1.bf16.msra.mxu0 0
      %312 = vmatprep.subr.bf16.mxu0 0
      %313 = vmatpush1.bf16.msra.mxu0 0
      %314 = vmatprep.subr.bf16.mxu0 0
      %315 = vmatpush1.bf16.msra.mxu0 0
      %316 = vmatprep.subr.bf16.mxu0 0
      %317 = vmatpush1.bf16.msra.mxu0 0
      %318 = vmatprep.subr.bf16.mxu0 0
      %319 = vmatpush1.bf16.msra.mxu0 0
      %320 = vmatprep.subr.bf16.mxu0 0
      %321 = vmatpush1.bf16.msra.mxu0 0
      %322 = vmatprep.subr.bf16.mxu0 0
      %323 = vmatpush1.bf16.msra.mxu0 0
      %324 = vmatprep.subr.bf16.mxu0 0
      %325 = vmatpush1.bf16.msra.mxu0 0
      %326 = vmatprep.subr.bf16.mxu0 0
      %327 = vmatpush1.bf16.msra.mxu0 0
      %328 = vmatprep.subr.bf16.mxu0 0
      %329 = vmatpush1.bf16.msra.mxu0 0
      %330 = vmatprep.subr.bf16.mxu0 0
      %331 = vmatpush1.bf16.msra.mxu0 0
      %332 = vmatprep.subr.bf16.mxu0 0
      %333 = vmatpush1.bf16.msra.mxu0 0
      %334 = vmatprep.mubr.bf16.mxu0 0
      %335 = vmatmul.mubr.bf16.gmra.mrb[0].mxu0 %v300
      %v336 = vpop.f32.mrb[0].mxu0
      %v337 = vadd.f32 0.0, %v336
      %v338 = vpop.f32.mrb[0].mxu0
      %v339 = vpop.f32.mrb[0].mxu0
      %v340 = vpop.f32.mrb[0].mxu0
      %341 = vdwg.mxu0
      %342 = vst [vmem:[%s249] sm:$0xff] %v337
      %343 = vadd.xlane.f32.xlu0 %v337
      %v344 = vpop.xlane.xlu0 %343
      %vm345 = vcmask 7168
      %346 = vst.msk [vmem:[%s256] sm:$0xff] %vm345, %v344
      %v347 = vmul.f32 %v337, %v337
      %348 = vadd.xlane.f32.xlu0 %v347
      %v349 = vpop.xlane.xlu0 %348
      %350 = vst.msk [vmem:[%s263] sm:$0xff] %vm345, %v349
      %p351 = scmp.lt.s32.totalorder %s20, 1
      %s352 = scalar_select %p351, %s20, 1
      %p353 = scmp.lt.s32.totalorder %s21, 0
      %s354 = scalar_select %p353, %s21, 0
      %s355 = sadd.s32 %s354, %s352
      %s356 = smul.addr %s355, 8
      %s357 = scalar_lea.vmem %s2, %s356
      %p358 = scmp.lt.s32.totalorder %s20, 1
      %s359 = scalar_select %p358, %s20, 1
      %p360 = scmp.lt.s32.totalorder %s21, 0
      %s361 = scalar_select %p360, %s21, 0
      %s362 = sadd.s32 %s361, %s359
      %s363 = smul.addr %s362, 8
      %s364 = scalar_lea.vmem %s3, %s363
      %p365 = scmp.lt.s32.totalorder %s20, 1
      %s366 = scalar_select %p365, %s20, 1
      %p367 = scmp.lt.s32.totalorder %s21, 0
      %s368 = scalar_select %p367, %s21, 0
      %s369 = sadd.s32 %s368, %s366
      %s370 = smul.addr %s369, 8
      %s371 = scalar_lea.vmem %s4, %s370
      // Predicated region
      $region29: #{down_forward.2} parent=27 // pred_check
        %p372 = pneg %p97
      $region30: #{down_forward.2} parent=27 // pred_check_branch
        %374 = sbr.rel (%p372) target = $region32
      $region31: #{down_forward.2} parent=27 // pred_region
        _
      $region32: #{down_forward.2} parent=27 // pred_fallthru
        _
      // Predicated region
      $region33: #{down_forward.2} parent=27 // pred_check
        %p375 = pneg %p125
      $region34: #{down_forward.2} parent=27 // pred_check_branch
        %377 = sbr.rel (%p375) target = $region36
      $region35: #{down_forward.2} parent=27 // pred_region
        _
      $region36: #{down_forward.2} parent=27 // pred_fallthru
        _
      // Predicated region
      $region37: #{down_forward.2} parent=27 // pred_check
        %p378 = pneg %p153
      $region38: #{down_forward.2} parent=27 // pred_check_branch
        %380 = sbr.rel (%p378) target = $region40
      $region39: #{down_forward.2} parent=27 // pred_region
        _
      $region40: #{down_forward.2} parent=27 // pred_fallthru
        _
    $region28: #{down_forward.2} parent=5 // pred_fallthru
      _
    %p381 = scmp.le.s32.totalorder 2, %s11
    // Predicated region
    $region41: #{down_forward.2} parent=5 // pred_check
      %p382 = pneg %p381
    $region42: #{down_forward.2} parent=5 // pred_check_branch
      %384 = sbr.rel (%p382) target = $region44
    $region43: #{down_forward.2} parent=5 // pred_region
      %s385 = ssub.s32 %s11, 2
      // Predicated region
      $region45: #{down_forward.2} parent=43 // pred_check
        %p386 = pneg %p103
      $region46: #{down_forward.2} parent=43 // pred_check_branch
        %388 = sbr.rel (%p386) target = $region48
      $region47: #{down_forward.2} parent=43 // pred_region
        %p389 = scmp.lt.s32.totalorder %s22, 1
        %s390 = scalar_select %p389, %s22, 1
        %p391 = scmp.lt.s32.totalorder %s23, 0
        %s392 = scalar_select %p391, %s23, 0
        %s393 = sadd.s32 %s392, %s390
        %s394 = smul.addr %s393, 8
        %s395 = scalar_lea.vmem %s2, %s394
      $region48: #{down_forward.2} parent=43 // pred_fallthru
        _
      // Predicated region
      $region49: #{down_forward.2} parent=43 // pred_check
        %p396 = pneg %p131
      $region50: #{down_forward.2} parent=43 // pred_check_branch
        %398 = sbr.rel (%p396) target = $region52
      $region51: #{down_forward.2} parent=43 // pred_region
        %p399 = scmp.lt.s32.totalorder %s22, 1
        %s400 = scalar_select %p399, %s22, 1
        %p401 = scmp.lt.s32.totalorder %s23, 0
        %s402 = scalar_select %p401, %s23, 0
        %s403 = sadd.s32 %s402, %s400
        %s404 = smul.addr %s403, 8
        %s405 = scalar_lea.vmem %s3, %s404
      $region52: #{down_forward.2} parent=43 // pred_fallthru
        _
      // Predicated region
      $region53: #{down_forward.2} parent=43 // pred_check
        %p406 = pneg %p159
      $region54: #{down_forward.2} parent=43 // pred_check_branch
        %408 = sbr.rel (%p406) target = $region56
      $region55: #{down_forward.2} parent=43 // pred_region
        %p409 = scmp.lt.s32.totalorder %s22, 1
        %s410 = scalar_select %p409, %s22, 1
        %p411 = scmp.lt.s32.totalorder %s23, 0
        %s412 = scalar_select %p411, %s23, 0
        %s413 = sadd.s32 %s412, %s410
        %s414 = smul.addr %s413, 8
        %s415 = scalar_lea.vmem %s4, %s414
      $region56: #{down_forward.2} parent=43 // pred_fallthru
        _
    $region44: #{down_forward.2} parent=5 // pred_fallthru
      _
  $region6: #{down_forward.2} parent=0 // loop_footer
    %s15 = sadd.s32 1, %s11
  $region7: #{down_forward.2} parent=0 // loop_footer_branch
    %10 = sbr.rel target = $region3
  $region8: #{down_forward.2} parent=0 // loop_exit
    _

</llo_original>
